<compile_context>
chip_gen: v6e
topology: v6e:2x2x1
jax: 0.10.0
libtpu: 0.0.40
codegen_flags: <defaults>
</compile_context>

<pallas_src>
import functools

import jax
import jax.numpy as jnp
from jax.experimental import pallas as pl
from jax.experimental.pallas import tpu as pltpu

H1 = 400
H2 = 300

# Lane-padded hidden sizes (multiples of 128).
H1_PAD = 512
H2_PAD = 384
LANE = 128
SUBLANE = 8


def _round_up(x, m):
    return (x + m - 1) // m * m


def q_mlp_kernel(x_ref, w1_ref, b1_ref, w2_ref, b2_ref, w3_ref, b3_ref, o_ref):
    """Fused 3-layer MLP. One batch tile per grid step; weights VMEM-resident."""
    w_dtype = w1_ref.dtype  # f32 or bf16; accumulation is always f32.
    x = x_ref[...]
    # fc1 + ReLU
    h1 = jnp.dot(x, w1_ref[...], preferred_element_type=jnp.float32) + b1_ref[...]
    h1 = jnp.maximum(h1, 0.0)
    # fc2 + ReLU
    h2 = (
        jnp.dot(h1.astype(w_dtype), w2_ref[...], preferred_element_type=jnp.float32)
        + b2_ref[...]
    )
    h2 = jnp.maximum(h2, 0.0)
    # fc3 (no activation)
    out = (
        jnp.dot(h2.astype(w_dtype), w3_ref[...], preferred_element_type=jnp.float32)
        + b3_ref[...]
    )
    o_ref[...] = out.astype(o_ref.dtype)


@functools.partial(jax.jit, static_argnames=("batch_tile", "use_bf16"))
def q_forward(x, params, batch_tile=256, use_bf16=False):
    """Run the fused Q MLP. x: (B, input_dim) float32. Returns (B, skip_dim) f32."""
    w1, b1, w2, b2, w3, b3 = params
    B, input_dim = x.shape
    skip_dim = w3.shape[1]

    # ---- pad feature dims to 128-lane multiples (zero padding is exact) ----
    k1 = _round_up(input_dim, LANE)
    n_out = _round_up(skip_dim, LANE)

    mm_dtype = jnp.bfloat16 if use_bf16 else jnp.float32

    xp = jnp.pad(x, ((0, 0), (0, k1 - input_dim)))
    w1p = jnp.pad(w1, ((0, k1 - input_dim), (0, H1_PAD - H1))).astype(mm_dtype)
    b1p = jnp.pad(b1, ((0, 0), (0, H1_PAD - H1)))  # biases stay f32
    w2p = jnp.pad(w2, ((0, H1_PAD - H1), (0, H2_PAD - H2))).astype(mm_dtype)
    b2p = jnp.pad(b2, ((0, 0), (0, H2_PAD - H2)))
    w3p = jnp.pad(w3, ((0, H2_PAD - H2), (0, n_out - skip_dim))).astype(mm_dtype)
    b3p = jnp.pad(b3, ((0, 0), (0, n_out - skip_dim)))

    # ---- batch tiling: big M tiles for the MXU, zero-pad the batch ----
    bt = min(batch_tile, _round_up(B, SUBLANE))
    bt = max(SUBLANE, _round_up(bt, SUBLANE))
    b_pad = _round_up(B, bt)
    xp = jnp.pad(xp, ((0, b_pad - B), (0, 0))).astype(mm_dtype)

    grid = (b_pad // bt,)  # >1 step for large B -> shards across v7x's 2 TCs

    rep2 = lambda i: (0, 0)  # weights/biases: constant block -> VMEM resident

    out_padded = pl.pallas_call(
        q_mlp_kernel,
        out_shape=jax.ShapeDtypeStruct((b_pad, n_out), jnp.float32),
        grid_spec=pltpu.PrefetchScalarGridSpec(
            num_scalar_prefetch=0,
            grid=grid,
            in_specs=[
                pl.BlockSpec((bt, k1), lambda i: (i, 0)),  # x
                pl.BlockSpec((k1, H1_PAD), rep2),          # w1
                pl.BlockSpec((1, H1_PAD), rep2),           # b1
                pl.BlockSpec((H1_PAD, H2_PAD), rep2),      # w2
                pl.BlockSpec((1, H2_PAD), rep2),           # b2
                pl.BlockSpec((H2_PAD, n_out), rep2),       # w3
                pl.BlockSpec((1, n_out), rep2),            # b3
            ],
            out_specs=pl.BlockSpec((bt, n_out), lambda i: (i, 0)),
        ),
        compiler_params=pltpu.CompilerParams(
            dimension_semantics=("parallel",),
        ),
    )(xp, w1p, b1p, w2p, b2p, w3p, b3p)

    return out_padded[:B, :skip_dim]


def init_params(key, input_dim, skip_dim):
    """Deterministic PyTorch-Linear-style init: U(-1/sqrt(fan_in), 1/sqrt(fan_in))."""
    ks = jax.random.split(key, 6)

    def linear(kw, kb, fan_in, fan_out):
        bound = 1.0 / jnp.sqrt(fan_in)
        w = jax.random.uniform(kw, (fan_in, fan_out), jnp.float32, -bound, bound)
        b = jax.random.uniform(kb, (1, fan_out), jnp.float32, -bound, bound)
        return w, b

    w1, b1 = linear(ks[0], ks[1], input_dim, H1)
    w2, b2 = linear(ks[2], ks[3], H1, H2)
    w3, b3 = linear(ks[4], ks[5], H2, skip_dim)
    return (w1, b1, w2, b2, w3, b3)


def q_reference(x, params):
    """Pure-JAX reference for correctness check."""
    w1, b1, w2, b2, w3, b3 = params
    h1 = jnp.maximum(x @ w1 + b1, 0.0)
    h2 = jnp.maximum(h1 @ w2 + b2, 0.0)
    return h2 @ w3 + b3


if __name__ == "__main__":
    key = jax.random.PRNGKey(0)
    k_param, k_x = jax.random.split(key)

    batch, input_dim, skip_dim = 8, 32, 8
    params = init_params(k_param, input_dim, skip_dim)
    x = jax.random.normal(k_x, (batch, input_dim), jnp.float32)

    ref = q_reference(x, params)

    # f32 path (exact-ish vs reference).
    out = jax.block_until_ready(q_forward(x, params))
    assert out.shape == (batch, skip_dim)
    assert jnp.allclose(out, ref, atol=1e-4, rtol=1e-4), "f32 mismatch vs reference"

    # bf16 matmul-input path (f32 biases + f32 accumulation), looser tolerance.
    out_bf16 = jax.block_until_ready(q_forward(x, params, use_bf16=True))
    assert out_bf16.shape == (batch, skip_dim)
    assert jnp.allclose(out_bf16, ref, atol=5e-2, rtol=5e-2), "bf16 mismatch vs reference"

    print("KERNEL_OK")
</pallas_src>

<mosaic_0001>
module attributes {stable_mosaic.version = 11 : i64} {
  func.func @q_mlp_kernel(%arg0: i32, %arg1: memref<8x128xf32, #tpu.memory_space<vmem>>, %arg2: memref<128x512xf32, #tpu.memory_space<vmem>>, %arg3: memref<1x512xf32, #tpu.memory_space<vmem>>, %arg4: memref<512x384xf32, #tpu.memory_space<vmem>>, %arg5: memref<1x384xf32, #tpu.memory_space<vmem>>, %arg6: memref<384x128xf32, #tpu.memory_space<vmem>>, %arg7: memref<1x128xf32, #tpu.memory_space<vmem>>, %arg8: memref<8x128xf32, #tpu.memory_space<vmem>>) attributes {dimension_semantics = [#tpu.dimension_semantics<parallel>], iteration_bounds = array<i64: 1>, scalar_prefetch = 0 : i64, scratch_operands = 0 : i64, tpu.core_type = #tpu.core_type<tc>, window_params = [{transform_indices = @transform_0, window_bounds = array<i64: 8, 128>}, {pipeline_mode = #tpu.pipeline_mode<synchronous>, transform_indices = @transform_1, window_bounds = array<i64: 128, 512>}, {pipeline_mode = #tpu.pipeline_mode<synchronous>, transform_indices = @transform_2, window_bounds = array<i64: 1, 512>}, {pipeline_mode = #tpu.pipeline_mode<synchronous>, transform_indices = @transform_3, window_bounds = array<i64: 512, 384>}, {pipeline_mode = #tpu.pipeline_mode<synchronous>, transform_indices = @transform_4, window_bounds = array<i64: 1, 384>}, {pipeline_mode = #tpu.pipeline_mode<synchronous>, transform_indices = @transform_5, window_bounds = array<i64: 384, 128>}, {pipeline_mode = #tpu.pipeline_mode<synchronous>, transform_indices = @transform_6, window_bounds = array<i64: 1, 128>}, {transform_indices = @transform_7, window_bounds = array<i64: 8, 128>}]} {
    %c0 = arith.constant 0 : index
    %c0_0 = arith.constant 0 : index
    %0 = vector.load %arg1[%c0, %c0_0] : memref<8x128xf32, #tpu.memory_space<vmem>>, vector<8x128xf32>
    %c0_1 = arith.constant 0 : index
    %c0_2 = arith.constant 0 : index
    %1 = vector.load %arg2[%c0_1, %c0_2] : memref<128x512xf32, #tpu.memory_space<vmem>>, vector<128x512xf32>
    %cst = arith.constant dense<0.000000e+00> : vector<8x512xf32>
    %2 = tpu.matmul %0, %1, %cst {dimension_numbers = #tpu.dot_dimension_numbers<[1], [0], [0], [1], [0, 0, 1, 1], [], []>} : vector<8x128xf32>, vector<128x512xf32>, vector<8x512xf32> -> vector<8x512xf32>
    %c0_3 = arith.constant 0 : index
    %c0_4 = arith.constant 0 : index
    %3 = vector.load %arg3[%c0_3, %c0_4] : memref<1x512xf32, #tpu.memory_space<vmem>>, vector<1x512xf32>
    %4 = vector.broadcast %3 : vector<1x512xf32> to vector<8x512xf32>
    %5 = arith.addf %2, %4 : vector<8x512xf32>
    %cst_5 = arith.constant 0.000000e+00 : f32
    %6 = vector.broadcast %cst_5 : f32 to vector<8x512xf32>
    %7 = arith.maximumf %5, %6 : vector<8x512xf32>
    %c0_6 = arith.constant 0 : index
    %c0_7 = arith.constant 0 : index
    %8 = vector.load %arg4[%c0_6, %c0_7] : memref<512x384xf32, #tpu.memory_space<vmem>>, vector<512x384xf32>
    %cst_8 = arith.constant dense<0.000000e+00> : vector<8x384xf32>
    %9 = tpu.matmul %7, %8, %cst_8 {dimension_numbers = #tpu.dot_dimension_numbers<[1], [0], [0], [1], [0, 0, 1, 1], [], []>} : vector<8x512xf32>, vector<512x384xf32>, vector<8x384xf32> -> vector<8x384xf32>
    %c0_9 = arith.constant 0 : index
    %c0_10 = arith.constant 0 : index
    %10 = vector.load %arg5[%c0_9, %c0_10] : memref<1x384xf32, #tpu.memory_space<vmem>>, vector<1x384xf32>
    %11 = vector.broadcast %10 : vector<1x384xf32> to vector<8x384xf32>
    %12 = arith.addf %9, %11 : vector<8x384xf32>
    %cst_11 = arith.constant 0.000000e+00 : f32
    %13 = vector.broadcast %cst_11 : f32 to vector<8x384xf32>
    %14 = arith.maximumf %12, %13 : vector<8x384xf32>
    %c0_12 = arith.constant 0 : index
    %c0_13 = arith.constant 0 : index
    %15 = vector.load %arg6[%c0_12, %c0_13] : memref<384x128xf32, #tpu.memory_space<vmem>>, vector<384x128xf32>
    %cst_14 = arith.constant dense<0.000000e+00> : vector<8x128xf32>
    %16 = tpu.matmul %14, %15, %cst_14 {dimension_numbers = #tpu.dot_dimension_numbers<[1], [0], [0], [1], [0, 0, 1, 1], [], []>} : vector<8x384xf32>, vector<384x128xf32>, vector<8x128xf32> -> vector<8x128xf32>
    %c0_15 = arith.constant 0 : index
    %c0_16 = arith.constant 0 : index
    %17 = vector.load %arg7[%c0_15, %c0_16] : memref<1x128xf32, #tpu.memory_space<vmem>>, vector<1x128xf32>
    %18 = vector.broadcast %17 : vector<1x128xf32> to vector<8x128xf32>
    %19 = arith.addf %16, %18 : vector<8x128xf32>
    %c0_17 = arith.constant 0 : index
    %c0_18 = arith.constant 0 : index
    %20 = vector.load %arg8[%c0_17, %c0_18] : memref<8x128xf32, #tpu.memory_space<vmem>>, vector<8x128xf32>
    tpu.vector_store %arg8[%c0_17, %c0_18], %19 {strides = array<i32>} : memref<8x128xf32, #tpu.memory_space<vmem>>, vector<8x128xf32>,
    return
  }
  func.func @transform_0(%arg0: i32) -> (i32, i32) {
    %c0_i32 = arith.constant 0 : i32
    %c0_i32_0 = arith.constant 0 : i32
    return %arg0, %c0_i32 : i32, i32
  }
  func.func @transform_1(%arg0: i32) -> (i32, i32) {
    %c0_i32 = arith.constant 0 : i32
    %c0_i32_0 = arith.constant 0 : i32
    %c0_i32_1 = arith.constant 0 : i32
    return %c0_i32, %c0_i32_0 : i32, i32
  }
  func.func @transform_2(%arg0: i32) -> (i32, i32) {
    %c0_i32 = arith.constant 0 : i32
    %c0_i32_0 = arith.constant 0 : i32
    %c0_i32_1 = arith.constant 0 : i32
    return %c0_i32, %c0_i32_0 : i32, i32
  }
  func.func @transform_3(%arg0: i32) -> (i32, i32) {
    %c0_i32 = arith.constant 0 : i32
    %c0_i32_0 = arith.constant 0 : i32
    %c0_i32_1 = arith.constant 0 : i32
    return %c0_i32, %c0_i32_0 : i32, i32
  }
  func.func @transform_4(%arg0: i32) -> (i32, i32) {
    %c0_i32 = arith.constant 0 : i32
    %c0_i32_0 = arith.constant 0 : i32
    %c0_i32_1 = arith.constant 0 : i32
    return %c0_i32, %c0_i32_0 : i32, i32
  }
  func.func @transform_5(%arg0: i32) -> (i32, i32) {
    %c0_i32 = arith.constant 0 : i32
    %c0_i32_0 = arith.constant 0 : i32
    %c0_i32_1 = arith.constant 0 : i32
    return %c0_i32, %c0_i32_0 : i32, i32
  }
  func.func @transform_6(%arg0: i32) -> (i32, i32) {
    %c0_i32 = arith.constant 0 : i32
    %c0_i32_0 = arith.constant 0 : i32
    %c0_i32_1 = arith.constant 0 : i32
    return %c0_i32, %c0_i32_0 : i32, i32
  }
  func.func @transform_7(%arg0: i32) -> (i32, i32) {
    %c0_i32 = arith.constant 0 : i32
    %c0_i32_0 = arith.constant 0 : i32
    return %arg0, %c0_i32 : i32, i32
  }
}

</mosaic_0001>

<llo_original>
// kernel: q_forward.1
$region0: #{q_forward.1}
  #allocation0 [shape = 'u32[]', space=smem, size = 0x4, offset = 0x4, fixed_abs, tag = 'smem constant byte address 0x4 - core index']
  #allocation1 [shape = 'u32[144,128]{1,0:T(1,128)}', space=vmem, size = 0x12000, scoped, tag = 'internal scratch']
  %s0 = inlined_call_operand.vmem [shape: f32[8,128], index: 0, kind: input, shape index: {}]
  %s1 = inlined_call_operand.vmem [shape: f32[128,512], index: 1, kind: input, shape index: {}]
  %s2 = inlined_call_operand.vmem [shape: f32[1,512], index: 2, kind: input, shape index: {}]
  %s3 = inlined_call_operand.vmem [shape: f32[512,384], index: 3, kind: input, shape index: {}]
  %s4 = inlined_call_operand.vmem [shape: f32[1,384], index: 4, kind: input, shape index: {}]
  %s5 = inlined_call_operand.vmem [shape: f32[384,128], index: 5, kind: input, shape index: {}]
  %s6 = inlined_call_operand.vmem [shape: f32[1,128], index: 6, kind: input, shape index: {}]
  %s7 = inlined_call_operand.hbm [shape: f32[8,128], index: 7, kind: output, shape index: {}]
  %s8 = sld [smem:[#allocation0]]
  $region38: #{q_forward.1} parent=0
    _
  %s10 = ssub.s32 1, %s8
  %s11 = scalar_select 0, %s10, %s8
  $region1: #{q_forward.1} parent=0
    #allocation2 [shape = 'u8[4096]{0}', space=vmem, size = 0x1000, scoped, tag = 'output window, operand 0, single buffered']
    #allocation3 [shape = 's32[1]{0}', space=sflag, size = 0x4, scoped, tag = 'scoped memory for q_forward.1']
    %12 = vsyncpa [#allocation3], 0
    // Predicated region
    $region2: #{q_forward.1} parent=1 // pred_check
      _
    $region3: #{q_forward.1} parent=1 // pred_check_branch
      %14 = sbr.rel (0) target = $region5
    $region4: #{q_forward.1} parent=1 // pred_region
      _
    $region5: #{q_forward.1} parent=1 // pred_fallthru
      _
    // Predicated region
    $region6: #{q_forward.1} parent=1 // pred_check
      _
    $region7: #{q_forward.1} parent=1 // pred_check_branch
      %16 = sbr.rel (0) target = $region9
    $region8: #{q_forward.1} parent=1 // pred_region
      _
    $region9: #{q_forward.1} parent=1 // pred_fallthru
      _
    // Predicated region
    $region10: #{q_forward.1} parent=1 // pred_check
      _
    $region11: #{q_forward.1} parent=1 // pred_check_branch
      %18 = sbr.rel (0) target = $region13
    $region12: #{q_forward.1} parent=1 // pred_region
      _
    $region13: #{q_forward.1} parent=1 // pred_fallthru
      _
    // Predicated region
    $region14: #{q_forward.1} parent=1 // pred_check
      _
    $region15: #{q_forward.1} parent=1 // pred_check_branch
      %20 = sbr.rel (0) target = $region17
    $region16: #{q_forward.1} parent=1 // pred_region
      _
    $region17: #{q_forward.1} parent=1 // pred_fallthru
      _
    // Predicated region
    $region18: #{q_forward.1} parent=1 // pred_check
      _
    $region19: #{q_forward.1} parent=1 // pred_check_branch
      %22 = sbr.rel (0) target = $region21
    $region20: #{q_forward.1} parent=1 // pred_region
      _
    $region21: #{q_forward.1} parent=1 // pred_fallthru
      _
    // Predicated region
    $region22: #{q_forward.1} parent=1 // pred_check
      _
    $region23: #{q_forward.1} parent=1 // pred_check_branch
      %24 = sbr.rel (0) target = $region25
    $region24: #{q_forward.1} parent=1 // pred_region
      _
    $region25: #{q_forward.1} parent=1 // pred_fallthru
      _
    // Predicated region
    $region26: #{q_forward.1} parent=1 // pred_check
      _
    $region27: #{q_forward.1} parent=1 // pred_check_branch
      %26 = sbr.rel (0) target = $region29
    $region28: #{q_forward.1} parent=1 // pred_region
      _
    $region29: #{q_forward.1} parent=1 // pred_fallthru
      _
    %v27 = vld [vmem:[%s0] sm:$0xff]
    %v28 = vld [vmem:[%s1] sm:$0xff]
    %v29 = vld [vmem:[%s1 + $0x8] sm:$0xff]
    %v30 = vld [vmem:[%s1 + $0x10] sm:$0xff]
    %v31 = vld [vmem:[%s1 + $0x18] sm:$0xff]
    %v32 = vld [vmem:[%s1 + $0x20] sm:$0xff]
    %v33 = vld [vmem:[%s1 + $0x28] sm:$0xff]
    %v34 = vld [vmem:[%s1 + $0x30] sm:$0xff]
    %v35 = vld [vmem:[%s1 + $0x38] sm:$0xff]
    %v36 = vld [vmem:[%s1 + $0x40] sm:$0xff]
    %v37 = vld [vmem:[%s1 + $0x48] sm:$0xff]
    %v38 = vld [vmem:[%s1 + $0x50] sm:$0xff]
    %v39 = vld [vmem:[%s1 + $0x58] sm:$0xff]
    %v40 = vld [vmem:[%s1 + $0x60] sm:$0xff]
    %v41 = vld [vmem:[%s1 + $0x68] sm:$0xff]
    %v42 = vld [vmem:[%s1 + $0x70] sm:$0xff]
    %v43 = vld [vmem:[%s1 + $0x78] sm:$0xff]
    %v44 = vld [vmem:[%s1 + $0x80] sm:$0xff]
    %v45 = vld [vmem:[%s1 + $0x88] sm:$0xff]
    %v46 = vld [vmem:[%s1 + $0x90] sm:$0xff]
    %v47 = vld [vmem:[%s1 + $0x98] sm:$0xff]
    %v48 = vld [vmem:[%s1 + $0xa0] sm:$0xff]
    %v49 = vld [vmem:[%s1 + $0xa8] sm:$0xff]
    %v50 = vld [vmem:[%s1 + $0xb0] sm:$0xff]
    %v51 = vld [vmem:[%s1 + $0xb8] sm:$0xff]
    %v52 = vld [vmem:[%s1 + $0xc0] sm:$0xff]
    %v53 = vld [vmem:[%s1 + $0xc8] sm:$0xff]
    %v54 = vld [vmem:[%s1 + $0xd0] sm:$0xff]
    %v55 = vld [vmem:[%s1 + $0xd8] sm:$0xff]
    %v56 = vld [vmem:[%s1 + $0xe0] sm:$0xff]
    %v57 = vld [vmem:[%s1 + $0xe8] sm:$0xff]
    %v58 = vld [vmem:[%s1 + $0xf0] sm:$0xff]
    %v59 = vld [vmem:[%s1 + $0xf8] sm:$0xff]
    %v60 = vld [vmem:[%s1 + $0x100] sm:$0xff]
    %v61 = vld [vmem:[%s1 + $0x108] sm:$0xff]
    %v62 = vld [vmem:[%s1 + $0x110] sm:$0xff]
    %v63 = vld [vmem:[%s1 + $0x118] sm:$0xff]
    %v64 = vld [vmem:[%s1 + $0x120] sm:$0xff]
    %v65 = vld [vmem:[%s1 + $0x128] sm:$0xff]
    %v66 = vld [vmem:[%s1 + $0x130] sm:$0xff]
    %v67 = vld [vmem:[%s1 + $0x138] sm:$0xff]
    %v68 = vld [vmem:[%s1 + $0x140] sm:$0xff]
    %v69 = vld [vmem:[%s1 + $0x148] sm:$0xff]
    %v70 = vld [vmem:[%s1 + $0x150] sm:$0xff]
    %v71 = vld [vmem:[%s1 + $0x158] sm:$0xff]
    %v72 = vld [vmem:[%s1 + $0x160] sm:$0xff]
    %v73 = vld [vmem:[%s1 + $0x168] sm:$0xff]
    %v74 = vld [vmem:[%s1 + $0x170] sm:$0xff]
    %v75 = vld [vmem:[%s1 + $0x178] sm:$0xff]
    %v76 = vld [vmem:[%s1 + $0x180] sm:$0xff]
    %v77 = vld [vmem:[%s1 + $0x188] sm:$0xff]
    %v78 = vld [vmem:[%s1 + $0x190] sm:$0xff]
    %v79 = vld [vmem:[%s1 + $0x198] sm:$0xff]
    %v80 = vld [vmem:[%s1 + $0x1a0] sm:$0xff]
    %v81 = vld [vmem:[%s1 + $0x1a8] sm:$0xff]
    %v82 = vld [vmem:[%s1 + $0x1b0] sm:$0xff]
    %v83 = vld [vmem:[%s1 + $0x1b8] sm:$0xff]
    %v84 = vld [vmem:[%s1 + $0x1c0] sm:$0xff]
    %v85 = vld [vmem:[%s1 + $0x1c8] sm:$0xff]
    %v86 = vld [vmem:[%s1 + $0x1d0] sm:$0xff]
    %v87 = vld [vmem:[%s1 + $0x1d8] sm:$0xff]
    %v88 = vld [vmem:[%s1 + $0x1e0] sm:$0xff]
    %v89 = vld [vmem:[%s1 + $0x1e8] sm:$0xff]
    %v90 = vld [vmem:[%s1 + $0x1f0] sm:$0xff]
    %v91 = vld [vmem:[%s1 + $0x1f8] sm:$0xff]
    %v92 = vld [vmem:[%s2] sm:$0xf]
    %v94 = vlaneseq
    %v95 = vshrl.u32 %v94, 7
    %v96 = vsub.s32 0, %v95
    %v97 = vrot.slane %v92, %v96
    %v98 = vlaneseq
    %v99 = vshrl.u32 %v98, 7
    %v100 = vsub.s32 1, %v99
    %v101 = vrot.slane %v92, %v100
    %v102 = vlaneseq
    %v103 = vshrl.u32 %v102, 7
    %v104 = vsub.s32 2, %v103
    %v105 = vrot.slane %v92, %v104
    %v106 = vlaneseq
    %v107 = vshrl.u32 %v106, 7
    %v108 = vsub.s32 3, %v107
    %v109 = vrot.slane %v92, %v108
    %114 = vmatprep.subr.mxu0 %v89
    %115 = vmatpush1.msra.mxu0 %v88
    %116 = vmatprep.subr.mxu0 %v85
    %117 = vmatpush1.msra.mxu0 %v84
    %118 = vmatprep.subr.mxu0 %v81
    %119 = vmatpush1.msra.mxu0 %v80
    %120 = vmatprep.subr.mxu0 %v77
    %121 = vmatpush1.msra.mxu0 %v76
    %122 = vmatprep.subr.mxu0 %v73
    %123 = vmatpush1.msra.mxu0 %v72
    %124 = vmatprep.subr.mxu0 %v69
    %125 = vmatpush1.msra.mxu0 %v68
    %126 = vmatprep.subr.mxu0 %v65
    %127 = vmatpush1.msra.mxu0 %v64
    %128 = vmatprep.subr.mxu0 %v61
    %129 = vmatpush1.msra.mxu0 %v60
    %130 = vmatprep.subr.mxu0 %v57
    %131 = vmatpush1.msra.mxu0 %v56
    %132 = vmatprep.subr.mxu0 %v53
    %133 = vmatpush1.msra.mxu0 %v52
    %134 = vmatprep.subr.mxu0 %v49
    %135 = vmatpush1.msra.mxu0 %v48
    %136 = vmatprep.subr.mxu0 %v45
    %137 = vmatpush1.msra.mxu0 %v44
    %138 = vmatprep.subr.mxu0 %v41
    %139 = vmatpush1.msra.mxu0 %v40
    %140 = vmatprep.subr.mxu0 %v37
    %141 = vmatpush1.msra.mxu0 %v36
    %142 = vmatprep.subr.mxu0 %v33
    %143 = vmatpush1.msra.mxu0 %v32
    %144 = vmatprep.subr.mxu0 %v29
    %145 = vmatpush1.msra.mxu0 %v28
    %146 = vmatprep.subr.mxu0 0.0
    %147 = vmatpush2.msra.mxu0 0.0
    %148 = vmatprep.subr.mxu0 0.0
    %149 = vmatpush2.msra.mxu0 0.0
    %150 = vmatprep.subr.mxu0 0.0
    %151 = vmatpush2.msra.mxu0 0.0
    %152 = vmatprep.subr.mxu0 0.0
    %153 = vmatpush2.msra.mxu0 0.0
    %154 = vmatprep.subr.mxu0 0.0
    %155 = vmatpush2.msra.mxu0 0.0
    %156 = vmatprep.subr.mxu0 0.0
    %157 = vmatpush2.msra.mxu0 0.0
    %158 = vmatprep.subr.mxu0 0.0
    %159 = vmatpush2.msra.mxu0 0.0
    %160 = vmatprep.subr.mxu0 0.0
    %161 = vmatpush2.msra.mxu0 0.0
    %162 = vmatprep.subr.mxu0 0.0
    %163 = vmatpush2.msra.mxu0 0.0
    %164 = vmatprep.subr.mxu0 0.0
    %165 = vmatpush2.msra.mxu0 0.0
    %166 = vmatprep.subr.mxu0 0.0
    %167 = vmatpush2.msra.mxu0 0.0
    %168 = vmatprep.subr.mxu0 0.0
    %169 = vmatpush2.msra.mxu0 0.0
    %170 = vmatprep.subr.mxu0 0.0
    %171 = vmatpush2.msra.mxu0 0.0
    %172 = vmatprep.subr.mxu0 0.0
    %173 = vmatpush2.msra.mxu0 0.0
    %174 = vmatprep.subr.mxu0 0.0
    %175 = vmatpush2.msra.mxu0 0.0
    %176 = vmatprep.subr.mxu0 0.0
    %177 = vmatpush2.msra.mxu0 0.0
    %178 = vmatprep.mubr.f32.mxu0 0.0
    %179 = vmatmul.mubr.f32.gmra.mxu0 %v27
    %v180 = vpop.f32.mrf.mxu0
    %v181 = vadd.f32 %v97, %v180
    %v182 = vpop.f32.mrf.mxu0
    %v183 = vadd.f32 %v101, %v182
    %184 = vdwg.mxu0
    %185 = vmatprep.subr.mxu0 %v91
    %186 = vmatpush1.msra.mxu0 %v90
    %187 = vmatprep.subr.mxu0 %v87
    %188 = vmatpush1.msra.mxu0 %v86
    %189 = vmatprep.subr.mxu0 %v83
    %190 = vmatpush1.msra.mxu0 %v82
    %191 = vmatprep.subr.mxu0 %v79
    %192 = vmatpush1.msra.mxu0 %v78
    %193 = vmatprep.subr.mxu0 %v75
    %194 = vmatpush1.msra.mxu0 %v74
    %195 = vmatprep.subr.mxu0 %v71
    %196 = vmatpush1.msra.mxu0 %v70
    %197 = vmatprep.subr.mxu0 %v67
    %198 = vmatpush1.msra.mxu0 %v66
    %199 = vmatprep.subr.mxu0 %v63
    %200 = vmatpush1.msra.mxu0 %v62
    %201 = vmatprep.subr.mxu0 %v59
    %202 = vmatpush1.msra.mxu0 %v58
    %203 = vmatprep.subr.mxu0 %v55
    %204 = vmatpush1.msra.mxu0 %v54
    %205 = vmatprep.subr.mxu0 %v51
    %206 = vmatpush1.msra.mxu0 %v50
    %207 = vmatprep.subr.mxu0 %v47
    %208 = vmatpush1.msra.mxu0 %v46
    %209 = vmatprep.subr.mxu0 %v43
    %210 = vmatpush1.msra.mxu0 %v42
    %211 = vmatprep.subr.mxu0 %v39
    %212 = vmatpush1.msra.mxu0 %v38
    %213 = vmatprep.subr.mxu0 %v35
    %214 = vmatpush1.msra.mxu0 %v34
    %215 = vmatprep.subr.mxu0 %v31
    %216 = vmatpush1.msra.mxu0 %v30
    %217 = vmatprep.subr.mxu0 0.0
    %218 = vmatpush2.msra.mxu0 0.0
    %219 = vmatprep.subr.mxu0 0.0
    %220 = vmatpush2.msra.mxu0 0.0
    %221 = vmatprep.subr.mxu0 0.0
    %222 = vmatpush2.msra.mxu0 0.0
    %223 = vmatprep.subr.mxu0 0.0
    %224 = vmatpush2.msra.mxu0 0.0
    %225 = vmatprep.subr.mxu0 0.0
    %226 = vmatpush2.msra.mxu0 0.0
    %227 = vmatprep.subr.mxu0 0.0
    %228 = vmatpush2.msra.mxu0 0.0
    %229 = vmatprep.subr.mxu0 0.0
    %230 = vmatpush2.msra.mxu0 0.0
    %231 = vmatprep.subr.mxu0 0.0
    %232 = vmatpush2.msra.mxu0 0.0
    %233 = vmatprep.subr.mxu0 0.0
    %234 = vmatpush2.msra.mxu0 0.0
    %235 = vmatprep.subr.mxu0 0.0
    %236 = vmatpush2.msra.mxu0 0.0
    %237 = vmatprep.subr.mxu0 0.0
    %238 = vmatpush2.msra.mxu0 0.0
    %239 = vmatprep.subr.mxu0 0.0
    %240 = vmatpush2.msra.mxu0 0.0
    %241 = vmatprep.subr.mxu0 0.0
    %242 = vmatpush2.msra.mxu0 0.0
    %243 = vmatprep.subr.mxu0 0.0
    %244 = vmatpush2.msra.mxu0 0.0
    %245 = vmatprep.subr.mxu0 0.0
    %246 = vmatpush2.msra.mxu0 0.0
    %247 = vmatprep.subr.mxu0 0.0
    %248 = vmatpush2.msra.mxu0 0.0
    %249 = vmatprep.mubr.f32.mxu0 0.0
    %250 = vmatmul.mubr.f32.gmra.mxu0 %v27
    %v251 = vpop.f32.mrf.mxu0
    %v252 = vadd.f32 %v105, %v251
    %v253 = vpop.f32.mrf.mxu0
    %v254 = vadd.f32 %v109, %v253
    %255 = vdwg.mxu0
    %v256 = vmax.f32 %v181, 0.0
    %v257 = vmax.f32 %v183, 0.0
    %v258 = vmax.f32 %v252, 0.0
    %v259 = vmax.f32 %v254, 0.0
    %v260 = vld [vmem:[%s3] sm:$0xff]
    %v261 = vld [vmem:[%s3 + $0x8] sm:$0xff]
    %v262 = vld [vmem:[%s3 + $0x10] sm:$0xff]
    %v263 = vld [vmem:[%s3 + $0x18] sm:$0xff]
    %v264 = vld [vmem:[%s3 + $0x20] sm:$0xff]
    %v265 = vld [vmem:[%s3 + $0x28] sm:$0xff]
    %v266 = vld [vmem:[%s3 + $0x30] sm:$0xff]
    %v267 = vld [vmem:[%s3 + $0x38] sm:$0xff]
    %v268 = vld [vmem:[%s3 + $0x40] sm:$0xff]
    %v269 = vld [vmem:[%s3 + $0x48] sm:$0xff]
    %v270 = vld [vmem:[%s3 + $0x50] sm:$0xff]
    %v271 = vld [vmem:[%s3 + $0x58] sm:$0xff]
    %v272 = vld [vmem:[%s3 + $0x60] sm:$0xff]
    %v273 = vld [vmem:[%s3 + $0x68] sm:$0xff]
    %v274 = vld [vmem:[%s3 + $0x70] sm:$0xff]
    %v275 = vld [vmem:[%s3 + $0x78] sm:$0xff]
    %v276 = vld [vmem:[%s3 + $0x80] sm:$0xff]
    %v277 = vld [vmem:[%s3 + $0x88] sm:$0xff]
    %v278 = vld [vmem:[%s3 + $0x90] sm:$0xff]
    %v279 = vld [vmem:[%s3 + $0x98] sm:$0xff]
    %v280 = vld [vmem:[%s3 + $0xa0] sm:$0xff]
    %v281 = vld [vmem:[%s3 + $0xa8] sm:$0xff]
    %v282 = vld [vmem:[%s3 + $0xb0] sm:$0xff]
    %v283 = vld [vmem:[%s3 + $0xb8] sm:$0xff]
    %v284 = vld [vmem:[%s3 + $0xc0] sm:$0xff]
    %v285 = vld [vmem:[%s3 + $0xc8] sm:$0xff]
    %v286 = vld [vmem:[%s3 + $0xd0] sm:$0xff]
    %v287 = vld [vmem:[%s3 + $0xd8] sm:$0xff]
    %v288 = vld [vmem:[%s3 + $0xe0] sm:$0xff]
    %v289 = vld [vmem:[%s3 + $0xe8] sm:$0xff]
    %v290 = vld [vmem:[%s3 + $0xf0] sm:$0xff]
    %v291 = vld [vmem:[%s3 + $0xf8] sm:$0xff]
    %v292 = vld [vmem:[%s3 + $0x100] sm:$0xff]
    %v293 = vld [vmem:[%s3 + $0x108] sm:$0xff]
    %v294 = vld [vmem:[%s3 + $0x110] sm:$0xff]
    %v295 = vld [vmem:[%s3 + $0x118] sm:$0xff]
    %v296 = vld [vmem:[%s3 + $0x120] sm:$0xff]
    %v297 = vld [vmem:[%s3 + $0x128] sm:$0xff]
    %v298 = vld [vmem:[%s3 + $0x130] sm:$0xff]
    %v299 = vld [vmem:[%s3 + $0x138] sm:$0xff]
    %v300 = vld [vmem:[%s3 + $0x140] sm:$0xff]
    %v301 = vld [vmem:[%s3 + $0x148] sm:$0xff]
    %v302 = vld [vmem:[%s3 + $0x150] sm:$0xff]
    %v303 = vld [vmem:[%s3 + $0x158] sm:$0xff]
    %v304 = vld [vmem:[%s3 + $0x160] sm:$0xff]
    %v305 = vld [vmem:[%s3 + $0x168] sm:$0xff]
    %v306 = vld [vmem:[%s3 + $0x170] sm:$0xff]
    %v307 = vld [vmem:[%s3 + $0x178] sm:$0xff]
    %v308 = vld [vmem:[%s3 + $0x180] sm:$0xff]
    %v309 = vld [vmem:[%s3 + $0x188] sm:$0xff]
    %v310 = vld [vmem:[%s3 + $0x190] sm:$0xff]
    %v311 = vld [vmem:[%s3 + $0x198] sm:$0xff]
    %v312 = vld [vmem:[%s3 + $0x1a0] sm:$0xff]
    %v313 = vld [vmem:[%s3 + $0x1a8] sm:$0xff]
    %v314 = vld [vmem:[%s3 + $0x1b0] sm:$0xff]
    %v315 = vld [vmem:[%s3 + $0x1b8] sm:$0xff]
    %v316 = vld [vmem:[%s3 + $0x1c0] sm:$0xff]
    %v317 = vld [vmem:[%s3 + $0x1c8] sm:$0xff]
    %v318 = vld [vmem:[%s3 + $0x1d0] sm:$0xff]
    %v319 = vld [vmem:[%s3 + $0x1d8] sm:$0xff]
    %v320 = vld [vmem:[%s3 + $0x1e0] sm:$0xff]
    %v321 = vld [vmem:[%s3 + $0x1e8] sm:$0xff]
    %v322 = vld [vmem:[%s3 + $0x1f0] sm:$0xff]
    %v323 = vld [vmem:[%s3 + $0x1f8] sm:$0xff]
    %v324 = vld [vmem:[%s3 + $0x200] sm:$0xff]
    %v325 = vld [vmem:[%s3 + $0x208] sm:$0xff]
    %v326 = vld [vmem:[%s3 + $0x210] sm:$0xff]
    %v327 = vld [vmem:[%s3 + $0x218] sm:$0xff]
    %v328 = vld [vmem:[%s3 + $0x220] sm:$0xff]
    %v329 = vld [vmem:[%s3 + $0x228] sm:$0xff]
    %v330 = vld [vmem:[%s3 + $0x230] sm:$0xff]
    %v331 = vld [vmem:[%s3 + $0x238] sm:$0xff]
    %v332 = vld [vmem:[%s3 + $0x240] sm:$0xff]
    %v333 = vld [vmem:[%s3 + $0x248] sm:$0xff]
    %v334 = vld [vmem:[%s3 + $0x250] sm:$0xff]
    %v335 = vld [vmem:[%s3 + $0x258] sm:$0xff]
    %v336 = vld [vmem:[%s3 + $0x260] sm:$0xff]
    %v337 = vld [vmem:[%s3 + $0x268] sm:$0xff]
    %v338 = vld [vmem:[%s3 + $0x270] sm:$0xff]
    %v339 = vld [vmem:[%s3 + $0x278] sm:$0xff]
    %v340 = vld [vmem:[%s3 + $0x280] sm:$0xff]
    %v341 = vld [vmem:[%s3 + $0x288] sm:$0xff]
    %v342 = vld [vmem:[%s3 + $0x290] sm:$0xff]
    %v343 = vld [vmem:[%s3 + $0x298] sm:$0xff]
    %v344 = vld [vmem:[%s3 + $0x2a0] sm:$0xff]
    %v345 = vld [vmem:[%s3 + $0x2a8] sm:$0xff]
    %v346 = vld [vmem:[%s3 + $0x2b0] sm:$0xff]
    %v347 = vld [vmem:[%s3 + $0x2b8] sm:$0xff]
    %v348 = vld [vmem:[%s3 + $0x2c0] sm:$0xff]
    %v349 = vld [vmem:[%s3 + $0x2c8] sm:$0xff]
    %v350 = vld [vmem:[%s3 + $0x2d0] sm:$0xff]
    %v351 = vld [vmem:[%s3 + $0x2d8] sm:$0xff]
    %v352 = vld [vmem:[%s3 + $0x2e0] sm:$0xff]
    %v353 = vld [vmem:[%s3 + $0x2e8] sm:$0xff]
    %v354 = vld [vmem:[%s3 + $0x2f0] sm:$0xff]
    %v355 = vld [vmem:[%s3 + $0x2f8] sm:$0xff]
    %v356 = vld [vmem:[%s3 + $0x300] sm:$0xff]
    %v357 = vld [vmem:[%s3 + $0x308] sm:$0xff]
    %v358 = vld [vmem:[%s3 + $0x310] sm:$0xff]
    %v359 = vld [vmem:[%s3 + $0x318] sm:$0xff]
    %v360 = vld [vmem:[%s3 + $0x320] sm:$0xff]
    %v361 = vld [vmem:[%s3 + $0x328] sm:$0xff]
    %v362 = vld [vmem:[%s3 + $0x330] sm:$0xff]
    %v363 = vld [vmem:[%s3 + $0x338] sm:$0xff]
    %v364 = vld [vmem:[%s3 + $0x340] sm:$0xff]
    %v365 = vld [vmem:[%s3 + $0x348] sm:$0xff]
    %v366 = vld [vmem:[%s3 + $0x350] sm:$0xff]
    %v367 = vld [vmem:[%s3 + $0x358] sm:$0xff]
    %v368 = vld [vmem:[%s3 + $0x360] sm:$0xff]
    %v369 = vld [vmem:[%s3 + $0x368] sm:$0xff]
    %v370 = vld [vmem:[%s3 + $0x370] sm:$0xff]
    %v371 = vld [vmem:[%s3 + $0x378] sm:$0xff]
    %v372 = vld [vmem:[%s3 + $0x380] sm:$0xff]
    %v373 = vld [vmem:[%s3 + $0x388] sm:$0xff]
    %v374 = vld [vmem:[%s3 + $0x390] sm:$0xff]
    %v375 = vld [vmem:[%s3 + $0x398] sm:$0xff]
    %v376 = vld [vmem:[%s3 + $0x3a0] sm:$0xff]
    %v377 = vld [vmem:[%s3 + $0x3a8] sm:$0xff]
    %v378 = vld [vmem:[%s3 + $0x3b0] sm:$0xff]
    %v379 = vld [vmem:[%s3 + $0x3b8] sm:$0xff]
    %v380 = vld [vmem:[%s3 + $0x3c0] sm:$0xff]
    %v381 = vld [vmem:[%s3 + $0x3c8] sm:$0xff]
    %v382 = vld [vmem:[%s3 + $0x3d0] sm:$0xff]
    %v383 = vld [vmem:[%s3 + $0x3d8] sm:$0xff]
    %v384 = vld [vmem:[%s3 + $0x3e0] sm:$0xff]
    %v385 = vld [vmem:[%s3 + $0x3e8] sm:$0xff]
    %v386 = vld [vmem:[%s3 + $0x3f0] sm:$0xff]
    %v387 = vld [vmem:[%s3 + $0x3f8] sm:$0xff]
    %v388 = vld [vmem:[%s3 + $0x400] sm:$0xff]
    %v389 = vld [vmem:[%s3 + $0x408] sm:$0xff]
    %v390 = vld [vmem:[%s3 + $0x410] sm:$0xff]
    %v391 = vld [vmem:[%s3 + $0x418] sm:$0xff]
    %v392 = vld [vmem:[%s3 + $0x420] sm:$0xff]
    %v393 = vld [vmem:[%s3 + $0x428] sm:$0xff]
    %v394 = vld [vmem:[%s3 + $0x430] sm:$0xff]
    %v395 = vld [vmem:[%s3 + $0x438] sm:$0xff]
    %v396 = vld [vmem:[%s3 + $0x440] sm:$0xff]
    %v397 = vld [vmem:[%s3 + $0x448] sm:$0xff]
    %v398 = vld [vmem:[%s3 + $0x450] sm:$0xff]
    %v399 = vld [vmem:[%s3 + $0x458] sm:$0xff]
    %v400 = vld [vmem:[%s3 + $0x460] sm:$0xff]
    %v401 = vld [vmem:[%s3 + $0x468] sm:$0xff]
    %v402 = vld [vmem:[%s3 + $0x470] sm:$0xff]
    %v403 = vld [vmem:[%s3 + $0x478] sm:$0xff]
    %v404 = vld [vmem:[%s3 + $0x480] sm:$0xff]
    %v405 = vld [vmem:[%s3 + $0x488] sm:$0xff]
    %v406 = vld [vmem:[%s3 + $0x490] sm:$0xff]
    %v407 = vld [vmem:[%s3 + $0x498] sm:$0xff]
    %v408 = vld [vmem:[%s3 + $0x4a0] sm:$0xff]
    %v409 = vld [vmem:[%s3 + $0x4a8] sm:$0xff]
    %v410 = vld [vmem:[%s3 + $0x4b0] sm:$0xff]
    %v411 = vld [vmem:[%s3 + $0x4b8] sm:$0xff]
    %v412 = vld [vmem:[%s3 + $0x4c0] sm:$0xff]
    %v413 = vld [vmem:[%s3 + $0x4c8] sm:$0xff]
    %v414 = vld [vmem:[%s3 + $0x4d0] sm:$0xff]
    %v415 = vld [vmem:[%s3 + $0x4d8] sm:$0xff]
    %v416 = vld [vmem:[%s3 + $0x4e0] sm:$0xff]
    %v417 = vld [vmem:[%s3 + $0x4e8] sm:$0xff]
    %v418 = vld [vmem:[%s3 + $0x4f0] sm:$0xff]
    %v419 = vld [vmem:[%s3 + $0x4f8] sm:$0xff]
    %v420 = vld [vmem:[%s3 + $0x500] sm:$0xff]
    %v421 = vld [vmem:[%s3 + $0x508] sm:$0xff]
    %v422 = vld [vmem:[%s3 + $0x510] sm:$0xff]
    %v423 = vld [vmem:[%s3 + $0x518] sm:$0xff]
    %v424 = vld [vmem:[%s3 + $0x520] sm:$0xff]
    %v425 = vld [vmem:[%s3 + $0x528] sm:$0xff]
    %v426 = vld [vmem:[%s3 + $0x530] sm:$0xff]
    %v427 = vld [vmem:[%s3 + $0x538] sm:$0xff]
    %v428 = vld [vmem:[%s3 + $0x540] sm:$0xff]
    %v429 = vld [vmem:[%s3 + $0x548] sm:$0xff]
    %v430 = vld [vmem:[%s3 + $0x550] sm:$0xff]
    %v431 = vld [vmem:[%s3 + $0x558] sm:$0xff]
    %v432 = vld [vmem:[%s3 + $0x560] sm:$0xff]
    %v433 = vld [vmem:[%s3 + $0x568] sm:$0xff]
    %v434 = vld [vmem:[%s3 + $0x570] sm:$0xff]
    %v435 = vld [vmem:[%s3 + $0x578] sm:$0xff]
    %v436 = vld [vmem:[%s3 + $0x580] sm:$0xff]
    %v437 = vld [vmem:[%s3 + $0x588] sm:$0xff]
    %v438 = vld [vmem:[%s3 + $0x590] sm:$0xff]
    %v439 = vld [vmem:[%s3 + $0x598] sm:$0xff]
    %v440 = vld [vmem:[%s3 + $0x5a0] sm:$0xff]
    %v441 = vld [vmem:[%s3 + $0x5a8] sm:$0xff]
    %v442 = vld [vmem:[%s3 + $0x5b0] sm:$0xff]
    %v443 = vld [vmem:[%s3 + $0x5b8] sm:$0xff]
    %v444 = vld [vmem:[%s3 + $0x5c0] sm:$0xff]
    %v445 = vld [vmem:[%s3 + $0x5c8] sm:$0xff]
    %v446 = vld [vmem:[%s3 + $0x5d0] sm:$0xff]
    %v447 = vld [vmem:[%s3 + $0x5d8] sm:$0xff]
    %v448 = vld [vmem:[%s3 + $0x5e0] sm:$0xff]
    %v449 = vld [vmem:[%s3 + $0x5e8] sm:$0xff]
    %v450 = vld [vmem:[%s3 + $0x5f0] sm:$0xff]
    %v451 = vld [vmem:[%s3 + $0x5f8] sm:$0xff]
    %v452 = vld [vmem:[%s4] sm:$0x7]
    %v454 = vlaneseq
    %v455 = vshrl.u32 %v454, 7
    %v456 = vsub.s32 0, %v455
    %v457 = vrot.slane %v452, %v456
    %v458 = vlaneseq
    %v459 = vshrl.u32 %v458, 7
    %v460 = vsub.s32 1, %v459
    %v461 = vrot.slane %v452, %v460
    %v462 = vlaneseq
    %v463 = vshrl.u32 %v462, 7
    %v464 = vsub.s32 2, %v463
    %v465 = vrot.slane %v452, %v464
    %469 = vmatprep.subr.mxu0 %v306
    %470 = vmatpush1.msra.mxu0 %v305
    %471 = vmatprep.subr.mxu0 %v303
    %472 = vmatpush1.msra.mxu0 %v302
    %473 = vmatprep.subr.mxu0 %v300
    %474 = vmatpush1.msra.mxu0 %v299
    %475 = vmatprep.subr.mxu0 %v297
    %476 = vmatpush1.msra.mxu0 %v296
    %477 = vmatprep.subr.mxu0 %v294
    %478 = vmatpush1.msra.mxu0 %v293
    %479 = vmatprep.subr.mxu0 %v291
    %480 = vmatpush1.msra.mxu0 %v290
    %481 = vmatprep.subr.mxu0 %v288
    %482 = vmatpush1.msra.mxu0 %v287
    %483 = vmatprep.subr.mxu0 %v285
    %484 = vmatpush1.msra.mxu0 %v284
    %485 = vmatprep.subr.mxu0 %v282
    %486 = vmatpush1.msra.mxu0 %v281
    %487 = vmatprep.subr.mxu0 %v279
    %488 = vmatpush1.msra.mxu0 %v278
    %489 = vmatprep.subr.mxu0 %v276
    %490 = vmatpush1.msra.mxu0 %v275
    %491 = vmatprep.subr.mxu0 %v273
    %492 = vmatpush1.msra.mxu0 %v272
    %493 = vmatprep.subr.mxu0 %v270
    %494 = vmatpush1.msra.mxu0 %v269
    %495 = vmatprep.subr.mxu0 %v267
    %496 = vmatpush1.msra.mxu0 %v266
    %497 = vmatprep.subr.mxu0 %v264
    %498 = vmatpush1.msra.mxu0 %v263
    %499 = vmatprep.subr.mxu0 %v261
    %500 = vmatpush1.msra.mxu0 %v260
    %501 = vmatprep.subr.mxu0 %v354
    %502 = vmatpush2.msra.mxu0 %v353
    %503 = vmatprep.subr.mxu0 %v351
    %504 = vmatpush2.msra.mxu0 %v350
    %505 = vmatprep.subr.mxu0 %v348
    %506 = vmatpush2.msra.mxu0 %v347
    %507 = vmatprep.subr.mxu0 %v345
    %508 = vmatpush2.msra.mxu0 %v344
    %509 = vmatprep.subr.mxu0 %v342
    %510 = vmatpush2.msra.mxu0 %v341
    %511 = vmatprep.subr.mxu0 %v339
    %512 = vmatpush2.msra.mxu0 %v338
    %513 = vmatprep.subr.mxu0 %v336
    %514 = vmatpush2.msra.mxu0 %v335
    %515 = vmatprep.subr.mxu0 %v333
    %516 = vmatpush2.msra.mxu0 %v332
    %517 = vmatprep.subr.mxu0 %v330
    %518 = vmatpush2.msra.mxu0 %v329
    %519 = vmatprep.subr.mxu0 %v327
    %520 = vmatpush2.msra.mxu0 %v326
    %521 = vmatprep.subr.mxu0 %v324
    %522 = vmatpush2.msra.mxu0 %v323
    %523 = vmatprep.subr.mxu0 %v321
    %524 = vmatpush2.msra.mxu0 %v320
    %525 = vmatprep.subr.mxu0 %v318
    %526 = vmatpush2.msra.mxu0 %v317
    %527 = vmatprep.subr.mxu0 %v315
    %528 = vmatpush2.msra.mxu0 %v314
    %529 = vmatprep.subr.mxu0 %v312
    %530 = vmatpush2.msra.mxu0 %v311
    %531 = vmatprep.subr.mxu0 %v309
    %532 = vmatpush2.msra.mxu0 %v308
    %533 = vmatprep.mubr.f32.mxu0 %v257
    %534 = vmatmul.mubr.f32.gmra.mxu0 %v256
    %v535 = vpop.f32.mrf.mxu0
    %v536 = vadd.f32 %v457, %v535
    %v537 = vpop.f32.mrf.mxu0
    %v538 = vadd.f32 %v461, %v537
    %539 = vdwg.mxu0
    %540 = vmatprep.subr.mxu0 %v402
    %541 = vmatpush1.msra.mxu0 %v401
    %542 = vmatprep.subr.mxu0 %v399
    %543 = vmatpush1.msra.mxu0 %v398
    %544 = vmatprep.subr.mxu0 %v396
    %545 = vmatpush1.msra.mxu0 %v395
    %546 = vmatprep.subr.mxu0 %v393
    %547 = vmatpush1.msra.mxu0 %v392
    %548 = vmatprep.subr.mxu0 %v390
    %549 = vmatpush1.msra.mxu0 %v389
    %550 = vmatprep.subr.mxu0 %v387
    %551 = vmatpush1.msra.mxu0 %v386
    %552 = vmatprep.subr.mxu0 %v384
    %553 = vmatpush1.msra.mxu0 %v383
    %554 = vmatprep.subr.mxu0 %v381
    %555 = vmatpush1.msra.mxu0 %v380
    %556 = vmatprep.subr.mxu0 %v378
    %557 = vmatpush1.msra.mxu0 %v377
    %558 = vmatprep.subr.mxu0 %v375
    %559 = vmatpush1.msra.mxu0 %v374
    %560 = vmatprep.subr.mxu0 %v372
    %561 = vmatpush1.msra.mxu0 %v371
    %562 = vmatprep.subr.mxu0 %v369
    %563 = vmatpush1.msra.mxu0 %v368
    %564 = vmatprep.subr.mxu0 %v366
    %565 = vmatpush1.msra.mxu0 %v365
    %566 = vmatprep.subr.mxu0 %v363
    %567 = vmatpush1.msra.mxu0 %v362
    %568 = vmatprep.subr.mxu0 %v360
    %569 = vmatpush1.msra.mxu0 %v359
    %570 = vmatprep.subr.mxu0 %v357
    %571 = vmatpush1.msra.mxu0 %v356
    %572 = vmatprep.subr.mxu0 %v450
    %573 = vmatpush2.msra.mxu0 %v449
    %574 = vmatprep.subr.mxu0 %v447
    %575 = vmatpush2.msra.mxu0 %v446
    %576 = vmatprep.subr.mxu0 %v444
    %577 = vmatpush2.msra.mxu0 %v443
    %578 = vmatprep.subr.mxu0 %v441
    %579 = vmatpush2.msra.mxu0 %v440
    %580 = vmatprep.subr.mxu0 %v438
    %581 = vmatpush2.msra.mxu0 %v437
    %582 = vmatprep.subr.mxu0 %v435
    %583 = vmatpush2.msra.mxu0 %v434
    %584 = vmatprep.subr.mxu0 %v432
    %585 = vmatpush2.msra.mxu0 %v431
    %586 = vmatprep.subr.mxu0 %v429
    %587 = vmatpush2.msra.mxu0 %v428
    %588 = vmatprep.subr.mxu0 %v426
    %589 = vmatpush2.msra.mxu0 %v425
    %590 = vmatprep.subr.mxu0 %v423
    %591 = vmatpush2.msra.mxu0 %v422
    %592 = vmatprep.subr.mxu0 %v420
    %593 = vmatpush2.msra.mxu0 %v419
    %594 = vmatprep.subr.mxu0 %v417
    %595 = vmatpush2.msra.mxu0 %v416
    %596 = vmatprep.subr.mxu0 %v414
    %597 = vmatpush2.msra.mxu0 %v413
    %598 = vmatprep.subr.mxu0 %v411
    %599 = vmatpush2.msra.mxu0 %v410
    %600 = vmatprep.subr.mxu0 %v408
    %601 = vmatpush2.msra.mxu0 %v407
    %602 = vmatprep.subr.mxu0 %v405
    %603 = vmatpush2.msra.mxu0 %v404
    %604 = vmatprep.mubr.f32.mxu0 %v259
    %605 = vmatmul.mubr.f32.gmra.mxu0 %v258
    %v606 = vpop.f32.mrf.mxu0
    %v607 = vadd.f32 %v536, %v606
    %v608 = vpop.f32.mrf.mxu0
    %v609 = vadd.f32 %v538, %v608
    %610 = vdwg.mxu0
    %611 = vmatprep.subr.mxu0 0.0
    %612 = vmatpush1.msra.mxu0 %v307
    %613 = vmatprep.subr.mxu0 0.0
    %614 = vmatpush1.msra.mxu0 %v304
    %615 = vmatprep.subr.mxu0 0.0
    %616 = vmatpush1.msra.mxu0 %v301
    %617 = vmatprep.subr.mxu0 0.0
    %618 = vmatpush1.msra.mxu0 %v298
    %619 = vmatprep.subr.mxu0 0.0
    %620 = vmatpush1.msra.mxu0 %v295
    %621 = vmatprep.subr.mxu0 0.0
    %622 = vmatpush1.msra.mxu0 %v292
    %623 = vmatprep.subr.mxu0 0.0
    %624 = vmatpush1.msra.mxu0 %v289
    %625 = vmatprep.subr.mxu0 0.0
    %626 = vmatpush1.msra.mxu0 %v286
    %627 = vmatprep.subr.mxu0 0.0
    %628 = vmatpush1.msra.mxu0 %v283
    %629 = vmatprep.subr.mxu0 0.0
    %630 = vmatpush1.msra.mxu0 %v280
    %631 = vmatprep.subr.mxu0 0.0
    %632 = vmatpush1.msra.mxu0 %v277
    %633 = vmatprep.subr.mxu0 0.0
    %634 = vmatpush1.msra.mxu0 %v274
    %635 = vmatprep.subr.mxu0 0.0
    %636 = vmatpush1.msra.mxu0 %v271
    %637 = vmatprep.subr.mxu0 0.0
    %638 = vmatpush1.msra.mxu0 %v268
    %639 = vmatprep.subr.mxu0 0.0
    %640 = vmatpush1.msra.mxu0 %v265
    %641 = vmatprep.subr.mxu0 0.0
    %642 = vmatpush1.msra.mxu0 %v262
    %643 = vmatprep.subr.mxu0 0.0
    %644 = vmatpush2.msra.mxu0 %v355
    %645 = vmatprep.subr.mxu0 0.0
    %646 = vmatpush2.msra.mxu0 %v352
    %647 = vmatprep.subr.mxu0 0.0
    %648 = vmatpush2.msra.mxu0 %v349
    %649 = vmatprep.subr.mxu0 0.0
    %650 = vmatpush2.msra.mxu0 %v346
    %651 = vmatprep.subr.mxu0 0.0
    %652 = vmatpush2.msra.mxu0 %v343
    %653 = vmatprep.subr.mxu0 0.0
    %654 = vmatpush2.msra.mxu0 %v340
    %655 = vmatprep.subr.mxu0 0.0
    %656 = vmatpush2.msra.mxu0 %v337
    %657 = vmatprep.subr.mxu0 0.0
    %658 = vmatpush2.msra.mxu0 %v334
    %659 = vmatprep.subr.mxu0 0.0
    %660 = vmatpush2.msra.mxu0 %v331
    %661 = vmatprep.subr.mxu0 0.0
    %662 = vmatpush2.msra.mxu0 %v328
    %663 = vmatprep.subr.mxu0 0.0
    %664 = vmatpush2.msra.mxu0 %v325
    %665 = vmatprep.subr.mxu0 0.0
    %666 = vmatpush2.msra.mxu0 %v322
    %667 = vmatprep.subr.mxu0 0.0
    %668 = vmatpush2.msra.mxu0 %v319
    %669 = vmatprep.subr.mxu0 0.0
    %670 = vmatpush2.msra.mxu0 %v316
    %671 = vmatprep.subr.mxu0 0.0
    %672 = vmatpush2.msra.mxu0 %v313
    %673 = vmatprep.subr.mxu0 0.0
    %674 = vmatpush2.msra.mxu0 %v310
    %675 = vmatprep.mubr.f32.mxu0 %v257
    %676 = vmatmul.mubr.f32.gmra.mxu0 %v256
    %v677 = vpop.f32.mrf.mxu0
    %v678 = vadd.f32 %v465, %v677
    %v679 = vpop.f32.mrf.mxu0
    %680 = vdwg.mxu0
    %681 = vmatprep.subr.mxu0 0.0
    %682 = vmatpush1.msra.mxu0 %v403
    %683 = vmatprep.subr.mxu0 0.0
    %684 = vmatpush1.msra.mxu0 %v400
    %685 = vmatprep.subr.mxu0 0.0
    %686 = vmatpush1.msra.mxu0 %v397
    %687 = vmatprep.subr.mxu0 0.0
    %688 = vmatpush1.msra.mxu0 %v394
    %689 = vmatprep.subr.mxu0 0.0
    %690 = vmatpush1.msra.mxu0 %v391
    %691 = vmatprep.subr.mxu0 0.0
    %692 = vmatpush1.msra.mxu0 %v388
    %693 = vmatprep.subr.mxu0 0.0
    %694 = vmatpush1.msra.mxu0 %v385
    %695 = vmatprep.subr.mxu0 0.0
    %696 = vmatpush1.msra.mxu0 %v382
    %697 = vmatprep.subr.mxu0 0.0
    %698 = vmatpush1.msra.mxu0 %v379
    %699 = vmatprep.subr.mxu0 0.0
    %700 = vmatpush1.msra.mxu0 %v376
    %701 = vmatprep.subr.mxu0 0.0
    %702 = vmatpush1.msra.mxu0 %v373
    %703 = vmatprep.subr.mxu0 0.0
    %704 = vmatpush1.msra.mxu0 %v370
    %705 = vmatprep.subr.mxu0 0.0
    %706 = vmatpush1.msra.mxu0 %v367
    %707 = vmatprep.subr.mxu0 0.0
    %708 = vmatpush1.msra.mxu0 %v364
    %709 = vmatprep.subr.mxu0 0.0
    %710 = vmatpush1.msra.mxu0 %v361
    %711 = vmatprep.subr.mxu0 0.0
    %712 = vmatpush1.msra.mxu0 %v358
    %713 = vmatprep.subr.mxu0 0.0
    %714 = vmatpush2.msra.mxu0 %v451
    %715 = vmatprep.subr.mxu0 0.0
    %716 = vmatpush2.msra.mxu0 %v448
    %717 = vmatprep.subr.mxu0 0.0
    %718 = vmatpush2.msra.mxu0 %v445
    %719 = vmatprep.subr.mxu0 0.0
    %720 = vmatpush2.msra.mxu0 %v442
    %721 = vmatprep.subr.mxu0 0.0
    %722 = vmatpush2.msra.mxu0 %v439
    %723 = vmatprep.subr.mxu0 0.0
    %724 = vmatpush2.msra.mxu0 %v436
    %725 = vmatprep.subr.mxu0 0.0
    %726 = vmatpush2.msra.mxu0 %v433
    %727 = vmatprep.subr.mxu0 0.0
    %728 = vmatpush2.msra.mxu0 %v430
    %729 = vmatprep.subr.mxu0 0.0
    %730 = vmatpush2.msra.mxu0 %v427
    %731 = vmatprep.subr.mxu0 0.0
    %732 = vmatpush2.msra.mxu0 %v424
    %733 = vmatprep.subr.mxu0 0.0
    %734 = vmatpush2.msra.mxu0 %v421
    %735 = vmatprep.subr.mxu0 0.0
    %736 = vmatpush2.msra.mxu0 %v418
    %737 = vmatprep.subr.mxu0 0.0
    %738 = vmatpush2.msra.mxu0 %v415
    %739 = vmatprep.subr.mxu0 0.0
    %740 = vmatpush2.msra.mxu0 %v412
    %741 = vmatprep.subr.mxu0 0.0
    %742 = vmatpush2.msra.mxu0 %v409
    %743 = vmatprep.subr.mxu0 0.0
    %744 = vmatpush2.msra.mxu0 %v406
    %745 = vmatprep.mubr.f32.mxu0 %v259
    %746 = vmatmul.mubr.f32.gmra.mxu0 %v258
    %v747 = vpop.f32.mrf.mxu0
    %v748 = vadd.f32 %v678, %v747
    %v749 = vpop.f32.mrf.mxu0
    %750 = vdwg.mxu0
    %v751 = vmax.f32 %v607, 0.0
    %v752 = vmax.f32 %v609, 0.0
    %v753 = vmax.f32 %v748, 0.0
    %v754 = vld [vmem:[%s5] sm:$0xff]
    %v755 = vld [vmem:[%s5 + $0x8] sm:$0xff]
    %v756 = vld [vmem:[%s5 + $0x10] sm:$0xff]
    %v757 = vld [vmem:[%s5 + $0x18] sm:$0xff]
    %v758 = vld [vmem:[%s5 + $0x20] sm:$0xff]
    %v759 = vld [vmem:[%s5 + $0x28] sm:$0xff]
    %v760 = vld [vmem:[%s5 + $0x30] sm:$0xff]
    %v761 = vld [vmem:[%s5 + $0x38] sm:$0xff]
    %v762 = vld [vmem:[%s5 + $0x40] sm:$0xff]
    %v763 = vld [vmem:[%s5 + $0x48] sm:$0xff]
    %v764 = vld [vmem:[%s5 + $0x50] sm:$0xff]
    %v765 = vld [vmem:[%s5 + $0x58] sm:$0xff]
    %v766 = vld [vmem:[%s5 + $0x60] sm:$0xff]
    %v767 = vld [vmem:[%s5 + $0x68] sm:$0xff]
    %v768 = vld [vmem:[%s5 + $0x70] sm:$0xff]
    %v769 = vld [vmem:[%s5 + $0x78] sm:$0xff]
    %v770 = vld [vmem:[%s5 + $0x80] sm:$0xff]
    %v771 = vld [vmem:[%s5 + $0x88] sm:$0xff]
    %v772 = vld [vmem:[%s5 + $0x90] sm:$0xff]
    %v773 = vld [vmem:[%s5 + $0x98] sm:$0xff]
    %v774 = vld [vmem:[%s5 + $0xa0] sm:$0xff]
    %v775 = vld [vmem:[%s5 + $0xa8] sm:$0xff]
    %v776 = vld [vmem:[%s5 + $0xb0] sm:$0xff]
    %v777 = vld [vmem:[%s5 + $0xb8] sm:$0xff]
    %v778 = vld [vmem:[%s5 + $0xc0] sm:$0xff]
    %v779 = vld [vmem:[%s5 + $0xc8] sm:$0xff]
    %v780 = vld [vmem:[%s5 + $0xd0] sm:$0xff]
    %v781 = vld [vmem:[%s5 + $0xd8] sm:$0xff]
    %v782 = vld [vmem:[%s5 + $0xe0] sm:$0xff]
    %v783 = vld [vmem:[%s5 + $0xe8] sm:$0xff]
    %v784 = vld [vmem:[%s5 + $0xf0] sm:$0xff]
    %v785 = vld [vmem:[%s5 + $0xf8] sm:$0xff]
    %v786 = vld [vmem:[%s5 + $0x100] sm:$0xff]
    %v787 = vld [vmem:[%s5 + $0x108] sm:$0xff]
    %v788 = vld [vmem:[%s5 + $0x110] sm:$0xff]
    %v789 = vld [vmem:[%s5 + $0x118] sm:$0xff]
    %v790 = vld [vmem:[%s5 + $0x120] sm:$0xff]
    %v791 = vld [vmem:[%s5 + $0x128] sm:$0xff]
    %v792 = vld [vmem:[%s5 + $0x130] sm:$0xff]
    %v793 = vld [vmem:[%s5 + $0x138] sm:$0xff]
    %v794 = vld [vmem:[%s5 + $0x140] sm:$0xff]
    %v795 = vld [vmem:[%s5 + $0x148] sm:$0xff]
    %v796 = vld [vmem:[%s5 + $0x150] sm:$0xff]
    %v797 = vld [vmem:[%s5 + $0x158] sm:$0xff]
    %v798 = vld [vmem:[%s5 + $0x160] sm:$0xff]
    %v799 = vld [vmem:[%s5 + $0x168] sm:$0xff]
    %v800 = vld [vmem:[%s5 + $0x170] sm:$0xff]
    %v801 = vld [vmem:[%s5 + $0x178] sm:$0xff]
    %v802 = vld [vmem:[%s6] sm:$0x1]
    %v804 = vlaneseq
    %v805 = vshrl.u32 %v804, 7
    %v806 = vsub.s32 0, %v805
    %v807 = vrot.slane %v802, %v806
    %809 = vmatprep.subr.mxu0 0.0
    %810 = vmatpush1.msra.mxu0 %v769
    %811 = vmatprep.subr.mxu0 0.0
    %812 = vmatpush1.msra.mxu0 %v768
    %813 = vmatprep.subr.mxu0 0.0
    %814 = vmatpush1.msra.mxu0 %v767
    %815 = vmatprep.subr.mxu0 0.0
    %816 = vmatpush1.msra.mxu0 %v766
    %817 = vmatprep.subr.mxu0 0.0
    %818 = vmatpush1.msra.mxu0 %v765
    %819 = vmatprep.subr.mxu0 0.0
    %820 = vmatpush1.msra.mxu0 %v764
    %821 = vmatprep.subr.mxu0 0.0
    %822 = vmatpush1.msra.mxu0 %v763
    %823 = vmatprep.subr.mxu0 0.0
    %824 = vmatpush1.msra.mxu0 %v762
    %825 = vmatprep.subr.mxu0 0.0
    %826 = vmatpush1.msra.mxu0 %v761
    %827 = vmatprep.subr.mxu0 0.0
    %828 = vmatpush1.msra.mxu0 %v760
    %829 = vmatprep.subr.mxu0 0.0
    %830 = vmatpush1.msra.mxu0 %v759
    %831 = vmatprep.subr.mxu0 0.0
    %832 = vmatpush1.msra.mxu0 %v758
    %833 = vmatprep.subr.mxu0 0.0
    %834 = vmatpush1.msra.mxu0 %v757
    %835 = vmatprep.subr.mxu0 0.0
    %836 = vmatpush1.msra.mxu0 %v756
    %837 = vmatprep.subr.mxu0 0.0
    %838 = vmatpush1.msra.mxu0 %v755
    %839 = vmatprep.subr.mxu0 0.0
    %840 = vmatpush1.msra.mxu0 %v754
    %841 = vmatprep.subr.mxu0 0.0
    %842 = vmatpush2.msra.mxu0 %v785
    %843 = vmatprep.subr.mxu0 0.0
    %844 = vmatpush2.msra.mxu0 %v784
    %845 = vmatprep.subr.mxu0 0.0
    %846 = vmatpush2.msra.mxu0 %v783
    %847 = vmatprep.subr.mxu0 0.0
    %848 = vmatpush2.msra.mxu0 %v782
    %849 = vmatprep.subr.mxu0 0.0
    %850 = vmatpush2.msra.mxu0 %v781
    %851 = vmatprep.subr.mxu0 0.0
    %852 = vmatpush2.msra.mxu0 %v780
    %853 = vmatprep.subr.mxu0 0.0
    %854 = vmatpush2.msra.mxu0 %v779
    %855 = vmatprep.subr.mxu0 0.0
    %856 = vmatpush2.msra.mxu0 %v778
    %857 = vmatprep.subr.mxu0 0.0
    %858 = vmatpush2.msra.mxu0 %v777
    %859 = vmatprep.subr.mxu0 0.0
    %860 = vmatpush2.msra.mxu0 %v776
    %861 = vmatprep.subr.mxu0 0.0
    %862 = vmatpush2.msra.mxu0 %v775
    %863 = vmatprep.subr.mxu0 0.0
    %864 = vmatpush2.msra.mxu0 %v774
    %865 = vmatprep.subr.mxu0 0.0
    %866 = vmatpush2.msra.mxu0 %v773
    %867 = vmatprep.subr.mxu0 0.0
    %868 = vmatpush2.msra.mxu0 %v772
    %869 = vmatprep.subr.mxu0 0.0
    %870 = vmatpush2.msra.mxu0 %v771
    %871 = vmatprep.subr.mxu0 0.0
    %872 = vmatpush2.msra.mxu0 %v770
    %873 = vmatprep.mubr.f32.mxu0 %v752
    %874 = vmatmul.mubr.f32.gmra.mxu0 %v751
    %v875 = vpop.f32.mrf.mxu0
    %v876 = vadd.f32 %v807, %v875
    %v877 = vpop.f32.mrf.mxu0
    %878 = vdwg.mxu0
    %879 = vmatprep.subr.mxu0 0.0
    %880 = vmatpush1.msra.mxu0 %v801
    %881 = vmatprep.subr.mxu0 0.0
    %882 = vmatpush1.msra.mxu0 %v800
    %883 = vmatprep.subr.mxu0 0.0
    %884 = vmatpush1.msra.mxu0 %v799
    %885 = vmatprep.subr.mxu0 0.0
    %886 = vmatpush1.msra.mxu0 %v798
    %887 = vmatprep.subr.mxu0 0.0
    %888 = vmatpush1.msra.mxu0 %v797
    %889 = vmatprep.subr.mxu0 0.0
    %890 = vmatpush1.msra.mxu0 %v796
    %891 = vmatprep.subr.mxu0 0.0
    %892 = vmatpush1.msra.mxu0 %v795
    %893 = vmatprep.subr.mxu0 0.0
    %894 = vmatpush1.msra.mxu0 %v794
    %895 = vmatprep.subr.mxu0 0.0
    %896 = vmatpush1.msra.mxu0 %v793
    %897 = vmatprep.subr.mxu0 0.0
    %898 = vmatpush1.msra.mxu0 %v792
    %899 = vmatprep.subr.mxu0 0.0
    %900 = vmatpush1.msra.mxu0 %v791
    %901 = vmatprep.subr.mxu0 0.0
    %902 = vmatpush1.msra.mxu0 %v790
    %903 = vmatprep.subr.mxu0 0.0
    %904 = vmatpush1.msra.mxu0 %v789
    %905 = vmatprep.subr.mxu0 0.0
    %906 = vmatpush1.msra.mxu0 %v788
    %907 = vmatprep.subr.mxu0 0.0
    %908 = vmatpush1.msra.mxu0 %v787
    %909 = vmatprep.subr.mxu0 0.0
    %910 = vmatpush1.msra.mxu0 %v786
    %911 = vmatprep.subr.mxu0 0.0
    %912 = vmatpush2.msra.mxu0 0.0
    %913 = vmatprep.subr.mxu0 0.0
    %914 = vmatpush2.msra.mxu0 0.0
    %915 = vmatprep.subr.mxu0 0.0
    %916 = vmatpush2.msra.mxu0 0.0
    %917 = vmatprep.subr.mxu0 0.0
    %918 = vmatpush2.msra.mxu0 0.0
    %919 = vmatprep.subr.mxu0 0.0
    %920 = vmatpush2.msra.mxu0 0.0
    %921 = vmatprep.subr.mxu0 0.0
    %922 = vmatpush2.msra.mxu0 0.0
    %923 = vmatprep.subr.mxu0 0.0
    %924 = vmatpush2.msra.mxu0 0.0
    %925 = vmatprep.subr.mxu0 0.0
    %926 = vmatpush2.msra.mxu0 0.0
    %927 = vmatprep.subr.mxu0 0.0
    %928 = vmatpush2.msra.mxu0 0.0
    %929 = vmatprep.subr.mxu0 0.0
    %930 = vmatpush2.msra.mxu0 0.0
    %931 = vmatprep.subr.mxu0 0.0
    %932 = vmatpush2.msra.mxu0 0.0
    %933 = vmatprep.subr.mxu0 0.0
    %934 = vmatpush2.msra.mxu0 0.0
    %935 = vmatprep.subr.mxu0 0.0
    %936 = vmatpush2.msra.mxu0 0.0
    %937 = vmatprep.subr.mxu0 0.0
    %938 = vmatpush2.msra.mxu0 0.0
    %939 = vmatprep.subr.mxu0 0.0
    %940 = vmatpush2.msra.mxu0 0.0
    %941 = vmatprep.subr.mxu0 0.0
    %942 = vmatpush2.msra.mxu0 0.0
    %943 = vmatprep.mubr.f32.mxu0 0.0
    %944 = vmatmul.mubr.f32.gmra.mxu0 %v753
    %v945 = vpop.f32.mrf.mxu0
    %v946 = vadd.f32 %v876, %v945
    %v947 = vpop.f32.mrf.mxu0
    %948 = vdwg.mxu0
    %949 = vst [vmem:[#allocation2] sm:$0xff] %v946
    // Predicated region
    $region30: #{q_forward.1} parent=1 // pred_check
      _
    $region31: #{q_forward.1} parent=1 // pred_check_branch
      %951 = sbr.rel (0) target = $region33
    $region32: #{q_forward.1} parent=1 // pred_region
      %s953 = ssub.s32 128, 128
      %954 = vsyncadd [#allocation3], %s953
      %s956 = sshll.u32 [#allocation2], 4
      %s957 = int_to_ptr.vmem [resolvable:$true] %s956
      %959 = dma.vmem_to_hbm [thread:$0]  %s957, 128, %s7, [#allocation3]
    $region33: #{q_forward.1} parent=1 // pred_fallthru
      _
    // Predicated region
    $region34: #{q_forward.1} parent=1 // pred_check
      _
    $region35: #{q_forward.1} parent=1 // pred_check_branch
      %961 = sbr.rel (0) target = $region37
    $region36: #{q_forward.1} parent=1 // pred_region
      %962 = dma.done [#allocation3], 128
    $region37: #{q_forward.1} parent=1 // pred_fallthru
      _
    %963 = vsyncpa [#allocation3], 1

</llo_original>
